<compile_context>
chip_gen: v6e
topology: v6e:2x2x1
jax: 0.10.0
libtpu: 0.0.40
codegen_flags: <defaults>
</compile_context>

<pallas_src>
import math

import jax
import jax.numpy as jnp
from jax.experimental import pallas as pl
from jax.experimental.pallas import tpu as pltpu

_INV_SQRT2 = 1.0 / math.sqrt(2.0)
_LANE = 128
_DEFAULT_TILE_ROWS = 8192  # 8192 x 128 f32 = 4 MiB per block


def _round_up(x, m):
    return (x + m - 1) // m * m


def _sublane_multiple(dtype):
    itemsize = jnp.dtype(dtype).itemsize
    if itemsize >= 4:
        return 8
    if itemsize == 2:
        return 16
    return 32


def _is_multi_tensorcore_chip():
    """True on chips where the 'parallel' grid axis shards across >1 TensorCore
    (v4 / v5p megacore, v7x). v2/v3/v5e/v6e expose a single TC per device."""
    try:
        kind = jax.devices()[0].device_kind.lower()
    except Exception:
        return False
    return any(tag in kind for tag in ("v4", "v5p", "v7"))


def _choose_tile_rows(rows, sublane, tile_rows, multi_tc):
    if multi_tc and rows >= 2 * sublane:
        # Balance block sizes across the two TensorCores: even block count,
        # all blocks (except possibly the last) equal-sized and <= ~tile_rows.
        nblocks = 2 * pl.cdiv(rows, 2 * tile_rows)
        return min(_round_up(pl.cdiv(rows, nblocks), sublane), rows)
    # Single-TC chip (or tiny input): the grid is a serial loop, so avoid
    # extra grid-step overhead; use one full-extent block when it fits.
    if rows <= tile_rows:
        return rows
    return tile_rows


def _make_gelu_kernel(compute_dtype):
    def kernel(x_ref, o_ref):
        x = x_ref[...].astype(compute_dtype)
        # Scalars are weakly typed -> math stays in compute_dtype.
        y = x * 0.5 * (1.0 + jax.lax.erf(x * _INV_SQRT2))
        o_ref[...] = y.astype(o_ref.dtype)

    return kernel


def _gelu_jnp(x, compute_dtype):
    xf = x.astype(compute_dtype)
    return (xf * 0.5 * (1.0 + jax.lax.erf(xf * _INV_SQRT2))).astype(x.dtype)


def custom_act(x, *, tile_rows=_DEFAULT_TILE_ROWS, compute_dtype=jnp.float32):
    """Exact-erf GELU via a Pallas TPU kernel. Any shape / floating dtype.

    compute_dtype: dtype of the in-kernel erf math. Default float32 (matches
    the PyTorch reference to tolerance). jnp.bfloat16 is an opt-in fast path
    for bf16 inputs on v6e/v7x (v5e has no bf16 VPU/EUP).
    """
    orig_shape = x.shape
    orig_dtype = x.dtype
    n = x.size
    if n == 0:
        return x

    x_flat = jnp.ravel(x)
    n_main = (n // _LANE) * _LANE

    # Inputs smaller than one lane row: plain jnp (kernel launch not worth it).
    if n_main == 0:
        return _gelu_jnp(x_flat, compute_dtype).reshape(orig_shape)

    rows = n_main // _LANE
    x2d = x_flat[:n_main].reshape(rows, _LANE)

    sublane = _sublane_multiple(orig_dtype)
    multi_tc = _is_multi_tensorcore_chip()
    tr = _choose_tile_rows(rows, sublane, tile_rows, multi_tc)
    grid = (pl.cdiv(rows, tr),)

    itemsize = jnp.dtype(orig_dtype).itemsize
    cost = pl.CostEstimate(
        flops=4 * n_main,
        transcendentals=n_main,
        bytes_accessed=2 * n_main * itemsize,
    )

    out2d = pl.pallas_call(
        _make_gelu_kernel(compute_dtype),
        out_shape=jax.ShapeDtypeStruct((rows, _LANE), orig_dtype),
        grid_spec=pltpu.PrefetchScalarGridSpec(
            num_scalar_prefetch=0,
            grid=grid,
            in_specs=[pl.BlockSpec((tr, _LANE), lambda i: (i, 0))],
            out_specs=pl.BlockSpec((tr, _LANE), lambda i: (i, 0)),
        ),
        compiler_params=pltpu.CompilerParams(
            dimension_semantics=("parallel",),
            vmem_limit_bytes=32 * 1024 * 1024,
        ),
        cost_estimate=cost,
    )(x2d)

    out_flat = out2d.reshape(-1)
    if n_main != n:
        # <128-element remainder: computed directly, then appended. Avoids the
        # full-array pad + slice passes of the previous version.
        tail = _gelu_jnp(x_flat[n_main:], compute_dtype)
        out_flat = jnp.concatenate([out_flat, tail])
    return out_flat.reshape(orig_shape)


def _reference(x):
    xf = x.astype(jnp.float32)
    return (xf * 0.5 * (1.0 + jax.lax.erf(xf * _INV_SQRT2))).astype(x.dtype)


if __name__ == "__main__":
    key = jax.random.PRNGKey(0)

    # Primary test: NCHW-like activation, lane-aligned element count.
    x = jax.random.normal(key, (2, 4, 16, 16), dtype=jnp.float32)
    y = custom_act(x)
    jax.block_until_ready(y)
    assert y.shape == x.shape and y.dtype == x.dtype
    assert jnp.allclose(y, _reference(x), atol=1e-6, rtol=1e-6), "mismatch vs reference"

    # Tail-only path: fewer than 128 elements.
    x2 = jax.random.normal(jax.random.PRNGKey(1), (3, 5, 7), dtype=jnp.float32)
    y2 = custom_act(x2)
    jax.block_until_ready(y2)
    assert y2.shape == x2.shape and y2.dtype == x2.dtype
    assert jnp.allclose(y2, _reference(x2), atol=1e-6, rtol=1e-6), "mismatch (tiny)"

    # Prefix + tail path: non-multiple-of-128 element count with a real prefix.
    x3 = jax.random.normal(jax.random.PRNGKey(2), (5, 130), dtype=jnp.float32)
    y3 = custom_act(x3)
    jax.block_until_ready(y3)
    assert y3.shape == x3.shape and y3.dtype == x3.dtype
    assert jnp.allclose(y3, _reference(x3), atol=1e-6, rtol=1e-6), "mismatch (prefix+tail)"

    # bf16 input, default f32 compute path (dtype-aware sublane handling).
    x4 = jax.random.normal(jax.random.PRNGKey(3), (4, 64), dtype=jnp.bfloat16)
    y4 = custom_act(x4)
    jax.block_until_ready(y4)
    assert y4.shape == x4.shape and y4.dtype == x4.dtype
    assert jnp.allclose(
        y4.astype(jnp.float32), _reference(x4).astype(jnp.float32), atol=1e-2
    ), "mismatch (bf16)"

    print("KERNEL_OK")
</pallas_src>

<mosaic_0001>
module attributes {stable_mosaic.version = 11 : i64} {
  func.func @kernel(%arg0: i32, %arg1: memref<16x128xf32, #tpu.memory_space<vmem>>, %arg2: memref<16x128xf32, #tpu.memory_space<vmem>>) attributes {dimension_semantics = [#tpu.dimension_semantics<parallel>], iteration_bounds = array<i64: 1>, scalar_prefetch = 0 : i64, scratch_operands = 0 : i64, tpu.core_type = #tpu.core_type<tc>, window_params = [{transform_indices = @transform_0, window_bounds = array<i64: 16, 128>}, {transform_indices = @transform_1, window_bounds = array<i64: 16, 128>}]} {
    %c0 = arith.constant 0 : index
    %c0_0 = arith.constant 0 : index
    %0 = vector.load %arg1[%c0, %c0_0] : memref<16x128xf32, #tpu.memory_space<vmem>>, vector<16x128xf32>
    %cst = arith.constant 5.000000e-01 : f32
    %1 = vector.broadcast %cst : f32 to vector<16x128xf32>
    %2 = arith.mulf %0, %1 : vector<16x128xf32>
    %cst_1 = arith.constant 0.707106769 : f32
    %3 = vector.broadcast %cst_1 : f32 to vector<16x128xf32>
    %4 = arith.mulf %0, %3 : vector<16x128xf32>
    %5 = math.erf %4 : vector<16x128xf32>
    %cst_2 = arith.constant 1.000000e+00 : f32
    %6 = vector.broadcast %cst_2 : f32 to vector<16x128xf32>
    %7 = arith.addf %6, %5 : vector<16x128xf32>
    %8 = arith.mulf %2, %7 : vector<16x128xf32>
    %c0_3 = arith.constant 0 : index
    %c0_4 = arith.constant 0 : index
    %9 = vector.load %arg2[%c0_3, %c0_4] : memref<16x128xf32, #tpu.memory_space<vmem>>, vector<16x128xf32>
    tpu.vector_store %arg2[%c0_3, %c0_4], %8 {strides = array<i32>} : memref<16x128xf32, #tpu.memory_space<vmem>>, vector<16x128xf32>,
    return
  }
  func.func @transform_0(%arg0: i32) -> (i32, i32) {
    %c0_i32 = arith.constant 0 : i32
    %c0_i32_0 = arith.constant 0 : i32
    return %arg0, %c0_i32 : i32, i32
  }
  func.func @transform_1(%arg0: i32) -> (i32, i32) {
    %c0_i32 = arith.constant 0 : i32
    %c0_i32_0 = arith.constant 0 : i32
    return %arg0, %c0_i32 : i32, i32
  }
}

</mosaic_0001>

<llo_original>
// kernel: tpu_custom_call.1
$region0: #{tpu_custom_call.1}
  #allocation0 [shape = 'u32[]', space=smem, size = 0x4, offset = 0x4, fixed_abs, tag = 'smem constant byte address 0x4 - core index']
  #allocation1 [shape = 'u32[144,128]{1,0:T(1,128)}', space=vmem, size = 0x12000, scoped, tag = 'internal scratch']
  %s0 = inlined_call_operand.hbm [shape: f32[16,128], index: 0, kind: input, shape index: {}]
  %s1 = inlined_call_operand.hbm [shape: f32[16,128], index: 1, kind: output, shape index: {}]
  %s2 = sld [smem:[#allocation0]]
  $region18: #{tpu_custom_call.1} parent=0
    _
  %s4 = ssub.s32 1, %s2
  %s5 = scalar_select 0, %s4, %s2
  $region1: #{tpu_custom_call.1} parent=0
    #allocation2 [shape = 'u8[8192]{0}', space=vmem, size = 0x2000, scoped, tag = 'input window, operand 0, single buffered']
    #allocation3 [shape = 's32[1]{0}', space=sflag, size = 0x4, scoped, tag = 'scoped memory for tpu_custom_call.1']
    #allocation4 [shape = 's32[1]{0}', space=sflag, size = 0x4, scoped, tag = 'scoped memory for tpu_custom_call.1']
    #allocation5 [shape = 'u8[8192]{0}', space=vmem, size = 0x2000, scoped, tag = 'output window, operand 0, single buffered']
    %6 = vsyncpa [#allocation3], 0
    %7 = vsyncpa [#allocation4], 0
    // Predicated region
    $region2: #{tpu_custom_call.1} parent=1 // pred_check
      _
    $region3: #{tpu_custom_call.1} parent=1 // pred_check_branch
      %9 = sbr.rel (0) target = $region5
    $region4: #{tpu_custom_call.1} parent=1 // pred_region
      %s11 = ssub.s32 256, 256
      %12 = vsyncadd [#allocation3], %s11
      %s13 = sshll.u32 [#allocation2], 4
      %s14 = int_to_ptr.vmem [resolvable:$true] %s13
      %19 = dma.hbm_to_vmem [thread:$0]  %s0, 256, %s14, [#allocation3], 128, 128, 8
    $region5: #{tpu_custom_call.1} parent=1 // pred_fallthru
      _
    // Predicated region
    $region6: #{tpu_custom_call.1} parent=1 // pred_check
      _
    $region7: #{tpu_custom_call.1} parent=1 // pred_check_branch
      %21 = sbr.rel (0) target = $region9
    $region8: #{tpu_custom_call.1} parent=1 // pred_region
      %22 = dma.done [#allocation3], 256
    $region9: #{tpu_custom_call.1} parent=1 // pred_fallthru
      _
    %v23 = vld [vmem:[#allocation2] sm:$0xff]
    %v24 = vld [vmem:[#allocation2 + $0x8] sm:$0xff]
    %v25 = vmul.f32 %v23, 0.5
    %v26 = vmul.f32 %v24, 0.5
    %v27 = vmul.f32 %v23, 0.70710677
    %v28 = vmul.f32 %v24, 0.70710677
    %v29 = verf.f32.pop %v27
    %v30 = verf.f32.pop %v28
    %v31 = vadd.f32 %v29, 1.0
    %v32 = vadd.f32 %v30, 1.0
    %v33 = vmul.f32 %v25, %v31
    %v34 = vmul.f32 %v26, %v32
    %35 = vst [vmem:[#allocation5] sm:$0xff] %v33
    %36 = vst [vmem:[#allocation5 + $0x8] sm:$0xff] %v34
    // Predicated region
    $region10: #{tpu_custom_call.1} parent=1 // pred_check
      _
    $region11: #{tpu_custom_call.1} parent=1 // pred_check_branch
      %38 = sbr.rel (0) target = $region13
    $region12: #{tpu_custom_call.1} parent=1 // pred_region
      %s40 = ssub.s32 256, 256
      %41 = vsyncadd [#allocation4], %s40
      %s42 = sshll.u32 [#allocation5], 4
      %s43 = int_to_ptr.vmem [resolvable:$true] %s42
      %48 = dma.vmem_to_hbm [thread:$0]  %s43, 256, %s1, [#allocation4], 128, 128, 8
    $region13: #{tpu_custom_call.1} parent=1 // pred_fallthru
      _
    // Predicated region
    $region14: #{tpu_custom_call.1} parent=1 // pred_check
      _
    $region15: #{tpu_custom_call.1} parent=1 // pred_check_branch
      %50 = sbr.rel (0) target = $region17
    $region16: #{tpu_custom_call.1} parent=1 // pred_region
      %51 = dma.done [#allocation4], 256
    $region17: #{tpu_custom_call.1} parent=1 // pred_fallthru
      _
    %52 = vsyncpa [#allocation3], 1
    %53 = vsyncpa [#allocation4], 1

</llo_original>
